<compile_context>
chip_gen: v6e
topology: v6e:2x2x1
jax: 0.10.0
libtpu: 0.0.40
codegen_flags: <defaults>
</compile_context>

<pallas_src>
import functools

import jax
import jax.numpy as jnp
from jax.experimental import pallas as pl
from jax.experimental.pallas import tpu as pltpu

BN_EPS = 1e-5


def _bn_relu_f32(h, gamma, beta):
    # Training-mode BatchNorm1d (biased batch variance) folded into one
    # scale/shift pass, followed by ReLU.  All f32 (v5e has no bf16 VPU/EUP).
    mean = jnp.mean(h, axis=0, keepdims=True)
    centered = h - mean                                  # hoisted once
    var = jnp.mean(centered * centered, axis=0, keepdims=True)
    scale = gamma * jax.lax.rsqrt(var + BN_EPS)          # EUP rsqrt
    return jnp.maximum(centered * scale + beta, 0.0)


def _residual_fused_kernel(x_ref, w_ref, gamma_ref, beta_ref, o_ref, *, matmul_dtype):
    """Single-block path: Linear + BN + ReLU + concat, one lane-dense store."""
    x = x_ref[...]                                       # (N, I), loaded once
    xm = x if matmul_dtype is None else x.astype(matmul_dtype)
    # MXU at the operands' native dtype, f32 accumulate.  Linear bias omitted:
    # training-mode BN's mean subtraction cancels it exactly.
    h = jnp.dot(xm, w_ref[...], preferred_element_type=jnp.float32)
    out = _bn_relu_f32(h, gamma_ref[...].astype(jnp.float32),
                       beta_ref[...].astype(jnp.float32))
    # Build [bn_relu | x] in registers -> single full-tile store (no masked
    # partial stores); passthrough reuses the x vregs loaded above.
    o_ref[...] = jnp.concatenate(
        [out.astype(o_ref.dtype), x.astype(o_ref.dtype)], axis=1)


def _residual_otile_kernel(x_ref, w_ref, gamma_ref, beta_ref, o_ref):
    """O-tiled grid path: one column tile of Linear + BN + ReLU per grid step."""
    h = jnp.dot(x_ref[...], w_ref[...], preferred_element_type=jnp.float32)
    o_ref[...] = _bn_relu_f32(
        h, gamma_ref[...].astype(jnp.float32),
        beta_ref[...].astype(jnp.float32)).astype(o_ref.dtype)


def residual_forward(x, w, gamma, beta, b=None, *, o_tile=256, matmul_dtype=None):
    """CTGAN Residual forward: concat([relu(bn_train(x @ w + b)), x], axis=1).

    x: (N, I).  w: (I, O) pre-transposed Linear weight.  gamma/beta: (1, O).
    `b` (Linear bias) is accepted for API parity but unused: training-mode
    BatchNorm's mean subtraction cancels it exactly.  NOT valid for eval-mode
    (running-stats) BN.

    matmul_dtype: optionally cast the matmul operands (e.g. jnp.bfloat16) for
    the fast MXU path on v6e/v7x; BN/ReLU math stays f32 and the x passthrough
    keeps x.dtype.
    """
    del b  # mathematically a no-op under training-mode BN
    n, i = x.shape
    i2, o = w.shape
    assert i2 == i, (x.shape, w.shape)
    gamma = jnp.asarray(gamma).reshape(1, o)
    beta = jnp.asarray(beta).reshape(1, o)
    wm = w if matmul_dtype is None else w.astype(matmul_dtype)

    # 32 MiB scoped VMEM: safe on v5e/v6e and leaves headroom under v7x's
    # 64 MiB physical VMEM even with double-buffered W / output tiles.
    vmem_limit = 32 << 20

    use_grid = (
        o_tile is not None
        and o_tile % 128 == 0      # keep every out/W tile 128-lane dense
        and o % o_tile == 0
        and o // o_tile > 1
    )

    if not use_grid:
        # Small / non-divisible shapes: single block, concat fused in-kernel.
        kernel = functools.partial(_residual_fused_kernel, matmul_dtype=matmul_dtype)
        return pl.pallas_call(
            kernel,
            out_shape=jax.ShapeDtypeStruct((n, o + i), x.dtype),
            in_specs=[
                pl.BlockSpec((n, i), lambda: (0, 0)),
                pl.BlockSpec((i, o), lambda: (0, 0)),
                pl.BlockSpec((1, o), lambda: (0, 0)),
                pl.BlockSpec((1, o), lambda: (0, 0)),
            ],
            out_specs=pl.BlockSpec((n, o + i), lambda: (0, 0)),
            compiler_params=pltpu.CompilerParams(vmem_limit_bytes=vmem_limit),
        )(x, wm, gamma, beta)

    # Production path: grid over the output-feature axis ("parallel" -> v7x can
    # shard it across both TensorCores).  x's block index is constant so it is
    # DMA'd once and stays resident; W / gamma / beta / out tiles double-buffer.
    xm = x if matmul_dtype is None else x.astype(matmul_dtype)
    bn_out = pl.pallas_call(
        _residual_otile_kernel,
        out_shape=jax.ShapeDtypeStruct((n, o), x.dtype),
        grid=(o // o_tile,),
        in_specs=[
            pl.BlockSpec((n, i), lambda j: (0, 0)),
            pl.BlockSpec((i, o_tile), lambda j: (0, j)),
            pl.BlockSpec((1, o_tile), lambda j: (0, j)),
            pl.BlockSpec((1, o_tile), lambda j: (0, j)),
        ],
        out_specs=pl.BlockSpec((n, o_tile), lambda j: (0, j)),
        compiler_params=pltpu.CompilerParams(
            dimension_semantics=("parallel",),
            vmem_limit_bytes=vmem_limit,
        ),
    )(xm, wm, gamma, beta)
    # The x passthrough is a contiguous copy; keeping it out of the tiled
    # kernel keeps every kernel store 128-lane dense and XLA fuses the concat.
    return jnp.concatenate([bn_out, x], axis=1)


if __name__ == "__main__":
    def reference(x, w, b, gamma, beta):
        h = jnp.dot(x, w, precision=jax.lax.Precision.HIGHEST) + b
        mean = jnp.mean(h, axis=0, keepdims=True)
        var = jnp.mean((h - mean) ** 2, axis=0, keepdims=True)
        out = jnp.maximum((h - mean) / jnp.sqrt(var + BN_EPS) * gamma + beta, 0.0)
        return jnp.concatenate([out, x], axis=1)

    root = jax.random.PRNGKey(0)
    k = jax.random.split(root, 6)

    # --- 1) Small shapes consistent with the module (single-block fused path).
    N, I, O = 8, 32, 64
    x = jax.random.normal(k[0], (N, I), jnp.float32)
    w = jax.random.normal(k[1], (I, O), jnp.float32) * 0.1     # pre-transposed Linear weight
    b = jax.random.normal(k[2], (1, O), jnp.float32) * 0.1     # Linear bias (cancelled by train-mode BN)
    gamma = 1.0 + 0.05 * jax.random.normal(k[3], (1, O), jnp.float32)
    beta = 0.05 * jax.random.normal(k[4], (1, O), jnp.float32)

    out = residual_forward(x, w, gamma, beta, b)
    jax.block_until_ready(out)
    assert out.shape == (N, O + I), out.shape
    err = float(jnp.max(jnp.abs(out - reference(x, w, b, gamma, beta))))
    assert err < 1e-4, err

    # --- 2) O-tiled grid path (production-style shapes, still modest).
    N2, I2, O2 = 64, 256, 512
    k2 = jax.random.split(k[5], 5)
    x2 = jax.random.normal(k2[0], (N2, I2), jnp.float32)
    w2 = jax.random.normal(k2[1], (I2, O2), jnp.float32) * 0.05
    b2 = jax.random.normal(k2[2], (1, O2), jnp.float32) * 0.1
    gamma2 = 1.0 + 0.05 * jax.random.normal(k2[3], (1, O2), jnp.float32)
    beta2 = 0.05 * jax.random.normal(k2[4], (1, O2), jnp.float32)

    out2 = residual_forward(x2, w2, gamma2, beta2, b2, o_tile=256)
    jax.block_until_ready(out2)
    assert out2.shape == (N2, O2 + I2), out2.shape
    err2 = float(jnp.max(jnp.abs(out2 - reference(x2, w2, b2, gamma2, beta2))))
    assert err2 < 2e-3, err2

    print("KERNEL_OK")
</pallas_src>

<mosaic_0001>
module attributes {stable_mosaic.version = 11 : i64} {
  func.func @_residual_fused_kernel(%arg0: memref<8x32xf32, #tpu.memory_space<vmem>>, %arg1: memref<32x64xf32, #tpu.memory_space<vmem>>, %arg2: memref<1x64xf32, #tpu.memory_space<vmem>>, %arg3: memref<1x64xf32, #tpu.memory_space<vmem>>, %arg4: memref<8x96xf32, #tpu.memory_space<vmem>>) attributes {dimension_semantics = [], scalar_prefetch = 0 : i64, scratch_operands = 0 : i64, tpu.core_type = #tpu.core_type<tc>} {
    %c0 = arith.constant 0 : index
    %c0_0 = arith.constant 0 : index
    %0 = vector.load %arg0[%c0, %c0_0] : memref<8x32xf32, #tpu.memory_space<vmem>>, vector<8x32xf32>
    %c0_1 = arith.constant 0 : index
    %c0_2 = arith.constant 0 : index
    %1 = vector.load %arg1[%c0_1, %c0_2] : memref<32x64xf32, #tpu.memory_space<vmem>>, vector<32x64xf32>
    %cst = arith.constant dense<0.000000e+00> : vector<8x64xf32>
    %2 = tpu.matmul %0, %1, %cst {dimension_numbers = #tpu.dot_dimension_numbers<[1], [0], [0], [1], [0, 0, 1, 1], [], []>} : vector<8x32xf32>, vector<32x64xf32>, vector<8x64xf32> -> vector<8x64xf32>
    %c0_3 = arith.constant 0 : index
    %c0_4 = arith.constant 0 : index
    %3 = vector.load %arg2[%c0_3, %c0_4] : memref<1x64xf32, #tpu.memory_space<vmem>>, vector<1x64xf32>
    %c0_5 = arith.constant 0 : index
    %c0_6 = arith.constant 0 : index
    %4 = vector.load %arg3[%c0_5, %c0_6] : memref<1x64xf32, #tpu.memory_space<vmem>>, vector<1x64xf32>
    %cst_7 = arith.constant dense<0.000000e+00> : vector<64xf32>
    %5 = vector.multi_reduction <add>, %2, %cst_7 [0] : vector<8x64xf32> to vector<64xf32>
    %6 = vector.shape_cast %5 : vector<64xf32> to vector<1x64xf32>
    %cst_8 = arith.constant 8.000000e+00 : f32
    %7 = vector.broadcast %cst_8 : f32 to vector<1x64xf32>
    %8 = arith.divf %6, %7 : vector<1x64xf32>
    %9 = vector.broadcast %8 : vector<1x64xf32> to vector<8x64xf32>
    %10 = arith.subf %2, %9 : vector<8x64xf32>
    %11 = arith.mulf %10, %10 : vector<8x64xf32>
    %cst_9 = arith.constant dense<0.000000e+00> : vector<64xf32>
    %12 = vector.multi_reduction <add>, %11, %cst_9 [0] : vector<8x64xf32> to vector<64xf32>
    %13 = vector.shape_cast %12 : vector<64xf32> to vector<1x64xf32>
    %cst_10 = arith.constant 8.000000e+00 : f32
    %14 = vector.broadcast %cst_10 : f32 to vector<1x64xf32>
    %15 = arith.divf %13, %14 : vector<1x64xf32>
    %cst_11 = arith.constant 9.99999974E-6 : f32
    %16 = vector.broadcast %cst_11 : f32 to vector<1x64xf32>
    %17 = arith.addf %15, %16 : vector<1x64xf32>
    %18 = math.rsqrt %17 : vector<1x64xf32>
    %19 = arith.mulf %3, %18 : vector<1x64xf32>
    %20 = vector.broadcast %19 : vector<1x64xf32> to vector<8x64xf32>
    %21 = arith.mulf %10, %20 : vector<8x64xf32>
    %22 = vector.broadcast %4 : vector<1x64xf32> to vector<8x64xf32>
    %23 = arith.addf %21, %22 : vector<8x64xf32>
    %cst_12 = arith.constant 0.000000e+00 : f32
    %24 = vector.broadcast %cst_12 : f32 to vector<8x64xf32>
    %25 = arith.maximumf %23, %24 : vector<8x64xf32>
    %26 = tpu.concatenate %25, %0 in 1 : vector<8x64xf32>, vector<8x32xf32> -> vector<8x96xf32>
    %c0_13 = arith.constant 0 : index
    %c0_14 = arith.constant 0 : index
    %27 = vector.load %arg4[%c0_13, %c0_14] : memref<8x96xf32, #tpu.memory_space<vmem>>, vector<8x96xf32>
    tpu.vector_store %arg4[%c0_13, %c0_14], %26 {strides = array<i32>} : memref<8x96xf32, #tpu.memory_space<vmem>>, vector<8x96xf32>,
    return
  }
}

</mosaic_0001>

<llo_original>
// kernel: tpu_custom_call.1
$region0: #{tpu_custom_call.1}
  #allocation0 [shape = 'u32[]', space=smem, size = 0x4, offset = 0x4, fixed_abs, tag = 'smem constant byte address 0x4 - core index']
  #allocation1 [shape = 'u32[144,128]{1,0:T(1,128)}', space=vmem, size = 0x12000, scoped, tag = 'internal scratch']
  %s0 = inlined_call_operand.hbm [shape: f32[8,32], index: 0, kind: input, shape index: {}]
  %s1 = inlined_call_operand.hbm [shape: f32[32,64], index: 1, kind: input, shape index: {}]
  %s2 = inlined_call_operand.vmem [shape: f32[1,64], index: 2, kind: input, shape index: {}]
  %s3 = inlined_call_operand.vmem [shape: f32[1,64], index: 3, kind: input, shape index: {}]
  %s4 = inlined_call_operand.hbm [shape: f32[8,96], index: 4, kind: output, shape index: {}]
  %s5 = sld [smem:[#allocation0]]
  $region34: #{tpu_custom_call.1} parent=0
    _
  %s7 = ssub.s32 1, %s5
  %s8 = scalar_select 0, %s7, %s5
  $region1: #{tpu_custom_call.1} parent=0
    #allocation2 [shape = 'u8[4096]{0}', space=vmem, size = 0x1000, scoped, tag = 'input window, operand 0, single buffered']
    #allocation3 [shape = 's32[1]{0}', space=sflag, size = 0x4, scoped, tag = 'scoped memory for tpu_custom_call.1']
    #allocation4 [shape = 's32[1]{0}', space=sflag, size = 0x4, scoped, tag = 'scoped memory for tpu_custom_call.1']
    #allocation5 [shape = 'u8[16384]{0}', space=vmem, size = 0x4000, scoped, tag = 'input window, operand 1, single buffered']
    #allocation6 [shape = 's32[1]{0}', space=sflag, size = 0x4, scoped, tag = 'scoped memory for tpu_custom_call.1']
    #allocation7 [shape = 'u8[4096]{0}', space=vmem, size = 0x1000, scoped, tag = 'output window, operand 0, single buffered']
    %9 = vsyncpa [#allocation3], 0
    %10 = vsyncpa [#allocation6], 0
    %11 = vsyncpa [#allocation4], 0
    // Predicated region
    $region2: #{tpu_custom_call.1} parent=1 // pred_check
      _
    $region3: #{tpu_custom_call.1} parent=1 // pred_check_branch
      %13 = sbr.rel (0) target = $region5
    $region4: #{tpu_custom_call.1} parent=1 // pred_region
      %s15 = ssub.s32 128, 128
      %16 = vsyncadd [#allocation3], %s15
      %s18 = sshll.u32 [#allocation2], 4
      %s19 = int_to_ptr.vmem [resolvable:$true] %s18
      %21 = dma.hbm_to_vmem [thread:$0]  %s0, 128, %s19, [#allocation3]
    $region5: #{tpu_custom_call.1} parent=1 // pred_fallthru
      _
    // Predicated region
    $region6: #{tpu_custom_call.1} parent=1 // pred_check
      _
    $region7: #{tpu_custom_call.1} parent=1 // pred_check_branch
      %23 = sbr.rel (0) target = $region9
    $region8: #{tpu_custom_call.1} parent=1 // pred_region
      %s25 = ssub.s32 512, 512
      %26 = vsyncadd [#allocation6], %s25
      %s27 = sshll.u32 [#allocation5], 4
      %s28 = int_to_ptr.vmem [resolvable:$true] %s27
      %33 = dma.hbm_to_vmem [thread:$0]  %s1, 512, %s28, [#allocation6], 128, 128, 8
    $region9: #{tpu_custom_call.1} parent=1 // pred_fallthru
      _
    // Predicated region
    $region10: #{tpu_custom_call.1} parent=1 // pred_check
      _
    $region11: #{tpu_custom_call.1} parent=1 // pred_check_branch
      %35 = sbr.rel (0) target = $region13
    $region12: #{tpu_custom_call.1} parent=1 // pred_region
      _
    $region13: #{tpu_custom_call.1} parent=1 // pred_fallthru
      _
    // Predicated region
    $region14: #{tpu_custom_call.1} parent=1 // pred_check
      _
    $region15: #{tpu_custom_call.1} parent=1 // pred_check_branch
      %37 = sbr.rel (0) target = $region17
    $region16: #{tpu_custom_call.1} parent=1 // pred_region
      _
    $region17: #{tpu_custom_call.1} parent=1 // pred_fallthru
      _
    // Predicated region
    $region18: #{tpu_custom_call.1} parent=1 // pred_check
      _
    $region19: #{tpu_custom_call.1} parent=1 // pred_check_branch
      %39 = sbr.rel (0) target = $region21
    $region20: #{tpu_custom_call.1} parent=1 // pred_region
      %40 = dma.done [#allocation3], 128
    $region21: #{tpu_custom_call.1} parent=1 // pred_fallthru
      _
    // Predicated region
    $region22: #{tpu_custom_call.1} parent=1 // pred_check
      _
    $region23: #{tpu_custom_call.1} parent=1 // pred_check_branch
      %42 = sbr.rel (0) target = $region25
    $region24: #{tpu_custom_call.1} parent=1 // pred_region
      %43 = dma.done [#allocation6], 512
    $region25: #{tpu_custom_call.1} parent=1 // pred_fallthru
      _
    %v44 = vld [vmem:[#allocation2] sm:$0xff]
    %v45 = vld [vmem:[#allocation5] sm:$0xff]
    %v46 = vld [vmem:[#allocation5 + $0x8] sm:$0xff]
    %v47 = vld [vmem:[#allocation5 + $0x10] sm:$0xff]
    %v48 = vld [vmem:[#allocation5 + $0x18] sm:$0xff]
    %vm49 = vcmask 261120
    %v51 = vsel %vm49, %v44, 0
    %53 = vmatprep.subr.mxu0 0.0
    %54 = vmatpush1.msra.mxu0 0.0
    %55 = vmatprep.subr.mxu0 0.0
    %56 = vmatpush1.msra.mxu0 0.0
    %57 = vmatprep.subr.mxu0 0.0
    %58 = vmatpush1.msra.mxu0 0.0
    %59 = vmatprep.subr.mxu0 0.0
    %60 = vmatpush1.msra.mxu0 0.0
    %61 = vmatprep.subr.mxu0 0.0
    %62 = vmatpush1.msra.mxu0 0.0
    %63 = vmatprep.subr.mxu0 0.0
    %64 = vmatpush1.msra.mxu0 0.0
    %65 = vmatprep.subr.mxu0 0.0
    %66 = vmatpush1.msra.mxu0 0.0
    %67 = vmatprep.subr.mxu0 0.0
    %68 = vmatpush1.msra.mxu0 0.0
    %69 = vmatprep.subr.mxu0 0.0
    %70 = vmatpush1.msra.mxu0 0.0
    %71 = vmatprep.subr.mxu0 0.0
    %72 = vmatpush1.msra.mxu0 0.0
    %73 = vmatprep.subr.mxu0 0.0
    %74 = vmatpush1.msra.mxu0 0.0
    %75 = vmatprep.subr.mxu0 0.0
    %76 = vmatpush1.msra.mxu0 0.0
    %77 = vmatprep.subr.mxu0 0.0
    %78 = vmatpush1.msra.mxu0 %v48
    %79 = vmatprep.subr.mxu0 0.0
    %80 = vmatpush1.msra.mxu0 %v47
    %81 = vmatprep.subr.mxu0 0.0
    %82 = vmatpush1.msra.mxu0 %v46
    %83 = vmatprep.subr.mxu0 0.0
    %84 = vmatpush1.msra.mxu0 %v45
    %85 = vmatprep.subr.mxu0 0.0
    %86 = vmatpush2.msra.mxu0 0.0
    %87 = vmatprep.subr.mxu0 0.0
    %88 = vmatpush2.msra.mxu0 0.0
    %89 = vmatprep.subr.mxu0 0.0
    %90 = vmatpush2.msra.mxu0 0.0
    %91 = vmatprep.subr.mxu0 0.0
    %92 = vmatpush2.msra.mxu0 0.0
    %93 = vmatprep.subr.mxu0 0.0
    %94 = vmatpush2.msra.mxu0 0.0
    %95 = vmatprep.subr.mxu0 0.0
    %96 = vmatpush2.msra.mxu0 0.0
    %97 = vmatprep.subr.mxu0 0.0
    %98 = vmatpush2.msra.mxu0 0.0
    %99 = vmatprep.subr.mxu0 0.0
    %100 = vmatpush2.msra.mxu0 0.0
    %101 = vmatprep.subr.mxu0 0.0
    %102 = vmatpush2.msra.mxu0 0.0
    %103 = vmatprep.subr.mxu0 0.0
    %104 = vmatpush2.msra.mxu0 0.0
    %105 = vmatprep.subr.mxu0 0.0
    %106 = vmatpush2.msra.mxu0 0.0
    %107 = vmatprep.subr.mxu0 0.0
    %108 = vmatpush2.msra.mxu0 0.0
    %109 = vmatprep.subr.mxu0 0.0
    %110 = vmatpush2.msra.mxu0 0.0
    %111 = vmatprep.subr.mxu0 0.0
    %112 = vmatpush2.msra.mxu0 0.0
    %113 = vmatprep.subr.mxu0 0.0
    %114 = vmatpush2.msra.mxu0 0.0
    %115 = vmatprep.subr.mxu0 0.0
    %116 = vmatpush2.msra.mxu0 0.0
    %117 = vmatprep.mubr.f32.mxu0 0.0
    %118 = vmatmul.mubr.f32.gmra.mxu0 %v51
    %v119 = vpop.f32.mrf.mxu0
    %v120 = vadd.f32 0.0, %v119
    %v121 = vpop.f32.mrf.mxu0
    %122 = vdwg.mxu0
    %v123 = vld [vmem:[%s2] sm:$0x1]
    %v124 = vld [vmem:[%s3] sm:$0x1]
    %vm125 = vcmask 523264
    %v126 = vsel %vm125, %v120, 0.0
    %v127 = vrot.slane %v126, 4
    %v128 = vadd.f32 %v126, %v127
    %v129 = vrot.slane %v128, 2
    %v130 = vadd.f32 %v128, %v129
    %v131 = vrot.slane %v130, 1
    %v132 = vadd.f32 %v130, %v131
    %v133 = vrcp.pop 8.0
    %v134 = vmul.f32 %v132, %v133
    %v135 = vsub.f32 %v120, %v134
    %v136 = vmul.f32 %v135, %v135
    %v137 = vsel %vm125, %v136, 0.0
    %v138 = vrot.slane %v137, 4
    %v139 = vadd.f32 %v137, %v138
    %v140 = vrot.slane %v139, 2
    %v141 = vadd.f32 %v139, %v140
    %v142 = vrot.slane %v141, 1
    %v143 = vadd.f32 %v141, %v142
    %v144 = vmul.f32 %v143, %v133
    %v145 = vadd.f32 %v144, 1e-05
    %v146 = vrsqrt.pop %v145
    %v147 = vmul.f32 %v123, %v146
    %v149 = vlaneseq
    %v150 = vshrl.u32 %v149, 7
    %v151 = vsub.s32 0, %v150
    %v152 = vrot.slane %v147, %v151
    %v154 = vmul.f32 %v135, %v152
    %v156 = vlaneseq
    %v157 = vshrl.u32 %v156, 7
    %v158 = vsub.s32 0, %v157
    %v159 = vrot.slane %v124, %v158
    %v161 = vadd.f32 %v154, %v159
    %v162 = vmax.f32 %v161, 0.0
    %163 = vrot.lane.b32.xlu0 %v44, 64
    %v164 = vpop.permute.xlu0 %163
    %v166 = vsel %vm125, %v162, %v164
    %vm167 = vcmask 785408
    %168 = vst.msk [vmem:[#allocation7] sm:$0xff] %vm167, %v166
    // Predicated region
    $region26: #{tpu_custom_call.1} parent=1 // pred_check
      _
    $region27: #{tpu_custom_call.1} parent=1 // pred_check_branch
      %170 = sbr.rel (0) target = $region29
    $region28: #{tpu_custom_call.1} parent=1 // pred_region
      %s172 = ssub.s32 128, 128
      %173 = vsyncadd [#allocation4], %s172
      %s175 = sshll.u32 [#allocation7], 4
      %s176 = int_to_ptr.vmem [resolvable:$true] %s175
      %178 = dma.vmem_to_hbm [thread:$0]  %s176, 128, %s4, [#allocation4]
    $region29: #{tpu_custom_call.1} parent=1 // pred_fallthru
      _
    // Predicated region
    $region30: #{tpu_custom_call.1} parent=1 // pred_check
      _
    $region31: #{tpu_custom_call.1} parent=1 // pred_check_branch
      %180 = sbr.rel (0) target = $region33
    $region32: #{tpu_custom_call.1} parent=1 // pred_region
      %181 = dma.done [#allocation4], 128
    $region33: #{tpu_custom_call.1} parent=1 // pred_fallthru
      _
    %182 = vsyncpa [#allocation3], 1
    %183 = vsyncpa [#allocation6], 1
    %184 = vsyncpa [#allocation4], 1

</llo_original>
